<compile_context>
chip_gen: v7x
topology: tpu7x:2x2x1
jax: 0.10.0
libtpu: 0.0.40
codegen_flags: <defaults>
</compile_context>

<pallas_src>
import functools

import jax
import jax.numpy as jnp
from jax.experimental import pallas as pl
from jax.experimental.pallas import tpu as pltpu


def _round_up(x, m):
    return ((x + m - 1) // m) * m


def _radpolytrig_kernel(nm_ref, a_ref, b_ref, c_ref, w_ref, bias_ref, o_ref, *,
                        approx_recip):
    """One M-tile: radial basis + fused (all-L) linear mix, M on lanes."""
    norm = nm_ref[0:1, :]                 # (1, Mt)   lane-dense
    mask = nm_ref[1:2, :] > 0.0           # (1, Mt)   bool (padded cols carry 0 -> masked)
    a = a_ref[...]                        # (nbf2, 1)
    b = b_ref[...]                        # (nbf2, 1)
    c = c_ref[...]                        # (nbf2, 1)

    cn = c * norm                         # (nbf2, Mt)
    den = 1.0 + cn * cn
    # approx_recip=True moves the reciprocal onto the otherwise idle EUP slot (~2^-12 rel
    # error, breaks the 1e-5 test tolerance -> opt-in; mainly a v5e win).
    inv = pl.reciprocal(den, approx=approx_recip)
    rad = jnp.where(mask, b * inv + a, 0.0)                       # (nbf2, Mt)

    # Single stacked matmul for all L levels: (n_rows, nbf2) @ (nbf2, Mt) -> (n_rows, Mt).
    # Do NOT split per-l or tile K/N: kernel is HBM/overhead-bound, not MXU-bound.
    out = jnp.dot(w_ref[...], rad, preferred_element_type=jnp.float32) + bias_ref[...]
    o_ref[...] = out.astype(o_ref.dtype)


def radpolytrig_forward(norms, edge_mask, params, *, max_zf, num_basis_fn, num_channels,
                        m_tile=None, out_dtype=jnp.float32, approx_reciprocal=False):
    s = norms.shape
    M = 1
    for d in s:
        M *= d
    L = max_zf + 1
    nbf2 = 2 * num_basis_fn
    nc2 = 2 * num_channels
    n_out = L * nc2
    n_rows = _round_up(n_out, 8)          # sublane padding for the stacked output rows

    # --- M tile selection -----------------------------------------------------------
    # Large tiles amortize the ~0.35 us fixed per-step pipeline overhead (per step only a
    # few hundred KiB move, so the kernel is step-overhead bound at small tiles).
    if m_tile is None:
        m_tile = 16384 if M >= 4 * 16384 else 8192
    # Keep >=4 tiles when M allows so the "parallel" grid axis shards across v7x's 2 TCs.
    m_tile = min(m_tile, _round_up((M + 3) // 4, 128))
    m_tile = max(128, _round_up(min(m_tile, M), 128))
    m_pad = _round_up(M, m_tile)
    num_tiles = m_pad // m_tile

    # --- input packing: norms + mask in a single (2, m_pad) block ---------------------
    norms_flat = norms.reshape(1, M).astype(jnp.float32)
    mask_flat = edge_mask.reshape(1, M).astype(jnp.float32)
    nm = jnp.pad(jnp.concatenate([norms_flat, mask_flat], axis=0),
                 ((0, 0), (0, m_pad - M)))            # padded cols: mask=0 -> zeroed output

    a = params["a"].reshape(nbf2, 1).astype(jnp.float32)
    b = params["b"].reshape(nbf2, 1).astype(jnp.float32)
    c = params["c"].reshape(nbf2, 1).astype(jnp.float32)

    # Stack all L linear layers; PyTorch Linear weight is already (out, in) so the kernel
    # never transposes. Pad output rows to a multiple of 8 with zero weight/bias.
    w_all = params["W"].reshape(n_out, nbf2).astype(jnp.float32)
    bias_all = params["bias"].reshape(n_out, 1).astype(jnp.float32)
    if n_rows != n_out:
        w_all = jnp.pad(w_all, ((0, n_rows - n_out), (0, 0)))
        bias_all = jnp.pad(bias_all, ((0, n_rows - n_out), (0, 0)))

    # --- VMEM budget (includes compiler-materialized temporaries), per-generation cap ---
    out_itemsize = jnp.dtype(out_dtype).itemsize
    tile_bytes = (
        2 * (2 * m_tile) * 4                       # packed norms+mask, double-buffered
        + 2 * (n_rows * m_tile) * out_itemsize     # output tile, double-buffered
        + 4 * (nbf2 * m_tile) * 4                  # cn / den / inv / rad f32 temporaries
        + (n_rows * m_tile) * 4                    # pre-cast f32 matmul result
        + 2 * (n_rows * nbf2 + n_rows + 3 * nbf2) * 4   # resident params (tiny)
    )
    try:
        phys_vmem = getattr(pltpu.get_tpu_info(), "vmem_capacity_bytes", 64 << 20)
    except Exception:
        phys_vmem = 64 << 20                       # conservative (v7x per-TC physical)
    vmem_cap = int(phys_vmem) * 3 // 4             # leave headroom for compiler scratch
    vmem_limit = min(max(2 * tile_bytes, 16 << 20), max(vmem_cap, 16 << 20))

    kernel = functools.partial(_radpolytrig_kernel, approx_recip=bool(approx_reciprocal))

    out = pl.pallas_call(
        kernel,
        out_shape=jax.ShapeDtypeStruct((n_rows, m_pad), out_dtype),
        grid_spec=pltpu.PrefetchScalarGridSpec(
            num_scalar_prefetch=0,
            grid=(num_tiles,),
            in_specs=[
                pl.BlockSpec((2, m_tile), lambda i: (0, i)),       # packed norms + mask
                pl.BlockSpec((nbf2, 1), lambda i: (0, 0)),         # a (resident)
                pl.BlockSpec((nbf2, 1), lambda i: (0, 0)),         # b
                pl.BlockSpec((nbf2, 1), lambda i: (0, 0)),         # c
                pl.BlockSpec((n_rows, nbf2), lambda i: (0, 0)),    # stacked weights
                pl.BlockSpec((n_rows, 1), lambda i: (0, 0)),       # stacked bias
            ],
            out_specs=pl.BlockSpec((n_rows, m_tile), lambda i: (0, i)),
        ),
        compiler_params=pltpu.CompilerParams(
            dimension_semantics=("parallel",),      # M tiles shard across TCs on v7x
            vmem_limit_bytes=vmem_limit,
        ),
    )(nm, a, b, c, w_all, bias_all)

    # --- glue back to PyTorch's GScalar layout {(l, l): (2,) + s + (num_channels,)} -----
    # Single slice + reshape + transpose for ALL L levels (one pass over the big array);
    # the per-l dict entries are cheap leading-axis slices of that result.
    # Kernel row ordering matches the PyTorch view/permute: row = l*nc2 + ch*2 + comp.
    # TODO(synk): ideally hand the lane-dense (n_rows, M) layout straight to the consumer
    # so this permute fuses into its first matmul instead of re-traversing HBM.
    out = out[:n_out, :M].reshape(L, num_channels, 2, M)
    out = jnp.transpose(out, (0, 2, 3, 1))                  # (L, 2, M, num_channels)
    out = out.reshape((L, 2) + s + (num_channels,))
    return {(l, l): out[l] for l in range(L)}


def radpolytrig_reference(norms, edge_mask, params, *, max_zf, num_basis_fn, num_channels):
    """Pure-JAX reference mirroring the PyTorch forward (mix=True, len(s)==3)."""
    s = norms.shape
    nbf2 = 2 * num_basis_fn
    em = edge_mask.astype(bool)[..., None]                  # s + (1,)
    n = norms[..., None].astype(jnp.float32)                # s + (1,)
    a = params["a"].reshape((1,) * len(s) + (nbf2,))
    b = params["b"].reshape((1,) * len(s) + (nbf2,))
    c = params["c"].reshape((1,) * len(s) + (nbf2,))
    rad = jnp.where(em, b / (1.0 + (c * n) ** 2) + a, 0.0)  # s + (nbf2,)
    outs = {}
    for l in range(max_zf + 1):
        y = rad @ params["W"][l].T + params["bias"][l]      # s + (2*nc,)
        y = y.reshape(s + (num_channels, 2))
        perm = (len(s) + 1,) + tuple(range(len(s))) + (len(s),)
        outs[(l, l)] = jnp.transpose(y, perm)
    return outs


if __name__ == "__main__":
    key = jax.random.PRNGKey(0)

    # Small shapes consistent with the module's (B, N_atom, N_atom) norms usage.
    # N=9 makes M=162 (not a multiple of 128) to exercise padding + a multi-tile grid
    # (the >=4-tile cap clamps m_tile to 128 here -> 2 grid steps).
    B, N = 2, 9
    max_zf, num_basis_fn, num_channels = 2, 8, 4
    L = max_zf + 1
    nbf2, nc2 = 2 * num_basis_fn, 2 * num_channels

    k_n, k_m, k_a, k_b, k_c, k_w, k_bias = jax.random.split(key, 7)
    norms = jax.random.uniform(k_n, (B, N, N), dtype=jnp.float32) * 3.0
    edge_mask = (jax.random.uniform(k_m, (B, N, N)) > 0.3).astype(jnp.int32)

    # Deterministic synthetic parameters (shapes from RadPolyTrig.__init__).
    params = {
        "a": jax.random.normal(k_a, (1, 1, 1, nbf2), dtype=jnp.float32),
        "b": jax.random.normal(k_b, (1, 1, 1, nbf2), dtype=jnp.float32),
        "c": jax.random.normal(k_c, (1, 1, 1, nbf2), dtype=jnp.float32),
        "W": jax.random.normal(k_w, (L, nc2, nbf2), dtype=jnp.float32) * 0.1,
        "bias": jax.random.normal(k_bias, (L, nc2), dtype=jnp.float32) * 0.1,
    }

    out = radpolytrig_forward(
        norms, edge_mask, params,
        max_zf=max_zf, num_basis_fn=num_basis_fn, num_channels=num_channels)
    out = jax.block_until_ready(out)

    ref = radpolytrig_reference(
        norms, edge_mask, params,
        max_zf=max_zf, num_basis_fn=num_basis_fn, num_channels=num_channels)
    for lkey in ref:
        assert out[lkey].shape == ref[lkey].shape == (2, B, N, N, num_channels)
        assert jnp.allclose(out[lkey], ref[lkey], atol=1e-5, rtol=1e-5)

    print("KERNEL_OK")
</pallas_src>

<mosaic_0001>
module attributes {stable_mosaic.version = 11 : i64} {
  func.func @_radpolytrig_kernel(%arg0: i32, %arg1: memref<2x128xf32, #tpu.memory_space<vmem>>, %arg2: memref<16x1xf32, #tpu.memory_space<vmem>>, %arg3: memref<16x1xf32, #tpu.memory_space<vmem>>, %arg4: memref<16x1xf32, #tpu.memory_space<vmem>>, %arg5: memref<24x16xf32, #tpu.memory_space<vmem>>, %arg6: memref<24x1xf32, #tpu.memory_space<vmem>>, %arg7: memref<24x128xf32, #tpu.memory_space<vmem>>) attributes {dimension_semantics = [#tpu.dimension_semantics<parallel>], iteration_bounds = array<i64: 2>, scalar_prefetch = 0 : i64, scratch_operands = 0 : i64, tpu.core_type = #tpu.core_type<tc>, window_params = [{transform_indices = @transform_0, window_bounds = array<i64: 2, 128>}, {pipeline_mode = #tpu.pipeline_mode<synchronous>, transform_indices = @transform_1, window_bounds = array<i64: 16, 1>}, {pipeline_mode = #tpu.pipeline_mode<synchronous>, transform_indices = @transform_2, window_bounds = array<i64: 16, 1>}, {pipeline_mode = #tpu.pipeline_mode<synchronous>, transform_indices = @transform_3, window_bounds = array<i64: 16, 1>}, {pipeline_mode = #tpu.pipeline_mode<synchronous>, transform_indices = @transform_4, window_bounds = array<i64: 24, 16>}, {pipeline_mode = #tpu.pipeline_mode<synchronous>, transform_indices = @transform_5, window_bounds = array<i64: 24, 1>}, {transform_indices = @transform_6, window_bounds = array<i64: 24, 128>}]} {
    %c0 = arith.constant 0 : index
    %c0_0 = arith.constant 0 : index
    %0 = vector.load %arg1[%c0, %c0_0] : memref<2x128xf32, #tpu.memory_space<vmem>>, vector<1x128xf32>
    %c1 = arith.constant 1 : index
    %c0_1 = arith.constant 0 : index
    %1 = vector.load %arg1[%c1, %c0_1] : memref<2x128xf32, #tpu.memory_space<vmem>>, vector<1x128xf32>
    %cst = arith.constant 0.000000e+00 : f32
    %2 = vector.broadcast %cst : f32 to vector<1x128xf32>
    %3 = arith.cmpf ogt, %1, %2 : vector<1x128xf32>
    %c0_2 = arith.constant 0 : index
    %c0_3 = arith.constant 0 : index
    %4 = vector.load %arg2[%c0_2, %c0_3] : memref<16x1xf32, #tpu.memory_space<vmem>>, vector<16x1xf32>
    %c0_4 = arith.constant 0 : index
    %c0_5 = arith.constant 0 : index
    %5 = vector.load %arg3[%c0_4, %c0_5] : memref<16x1xf32, #tpu.memory_space<vmem>>, vector<16x1xf32>
    %c0_6 = arith.constant 0 : index
    %c0_7 = arith.constant 0 : index
    %6 = vector.load %arg4[%c0_6, %c0_7] : memref<16x1xf32, #tpu.memory_space<vmem>>, vector<16x1xf32>
    %7 = vector.broadcast %6 : vector<16x1xf32> to vector<16x128xf32>
    %8 = vector.broadcast %0 : vector<1x128xf32> to vector<16x128xf32>
    %9 = arith.mulf %7, %8 : vector<16x128xf32>
    %10 = arith.mulf %9, %9 : vector<16x128xf32>
    %cst_8 = arith.constant 1.000000e+00 : f32
    %11 = vector.broadcast %cst_8 : f32 to vector<16x128xf32>
    %12 = arith.addf %11, %10 : vector<16x128xf32>
    %13 = tpu.reciprocal %12 : vector<16x128xf32> -> vector<16x128xf32>
    %14 = vector.broadcast %5 : vector<16x1xf32> to vector<16x128xf32>
    %15 = arith.mulf %14, %13 : vector<16x128xf32>
    %16 = vector.broadcast %4 : vector<16x1xf32> to vector<16x128xf32>
    %17 = arith.addf %15, %16 : vector<16x128xf32>
    %cst_9 = arith.constant 0.000000e+00 : f32
    %18 = vector.shape_cast %3 : vector<1x128xi1> to vector<1x128xi1>
    %19 = vector.broadcast %18 : vector<1x128xi1> to vector<16x128xi1>
    %20 = vector.broadcast %cst_9 : f32 to vector<16x128xf32>
    %21 = arith.select %19, %17, %20 : vector<16x128xi1>, vector<16x128xf32>
    %c0_10 = arith.constant 0 : index
    %c0_11 = arith.constant 0 : index
    %22 = vector.load %arg5[%c0_10, %c0_11] : memref<24x16xf32, #tpu.memory_space<vmem>>, vector<24x16xf32>
    %cst_12 = arith.constant dense<0.000000e+00> : vector<24x128xf32>
    %23 = tpu.matmul %22, %21, %cst_12 {dimension_numbers = #tpu.dot_dimension_numbers<[1], [0], [0], [1], [0, 0, 1, 1], [], []>} : vector<24x16xf32>, vector<16x128xf32>, vector<24x128xf32> -> vector<24x128xf32>
    %c0_13 = arith.constant 0 : index
    %c0_14 = arith.constant 0 : index
    %24 = vector.load %arg6[%c0_13, %c0_14] : memref<24x1xf32, #tpu.memory_space<vmem>>, vector<24x1xf32>
    %25 = vector.broadcast %24 : vector<24x1xf32> to vector<24x128xf32>
    %26 = arith.addf %23, %25 : vector<24x128xf32>
    %c0_15 = arith.constant 0 : index
    %c0_16 = arith.constant 0 : index
    %27 = vector.load %arg7[%c0_15, %c0_16] : memref<24x128xf32, #tpu.memory_space<vmem>>, vector<24x128xf32>
    tpu.vector_store %arg7[%c0_15, %c0_16], %26 {strides = array<i32>} : memref<24x128xf32, #tpu.memory_space<vmem>>, vector<24x128xf32>,
    return
  }
  func.func @transform_0(%arg0: i32) -> (i32, i32) {
    %c0_i32 = arith.constant 0 : i32
    %c0_i32_0 = arith.constant 0 : i32
    return %c0_i32, %arg0 : i32, i32
  }
  func.func @transform_1(%arg0: i32) -> (i32, i32) {
    %c0_i32 = arith.constant 0 : i32
    %c0_i32_0 = arith.constant 0 : i32
    %c0_i32_1 = arith.constant 0 : i32
    return %c0_i32, %c0_i32_0 : i32, i32
  }
  func.func @transform_2(%arg0: i32) -> (i32, i32) {
    %c0_i32 = arith.constant 0 : i32
    %c0_i32_0 = arith.constant 0 : i32
    %c0_i32_1 = arith.constant 0 : i32
    return %c0_i32, %c0_i32_0 : i32, i32
  }
  func.func @transform_3(%arg0: i32) -> (i32, i32) {
    %c0_i32 = arith.constant 0 : i32
    %c0_i32_0 = arith.constant 0 : i32
    %c0_i32_1 = arith.constant 0 : i32
    return %c0_i32, %c0_i32_0 : i32, i32
  }
  func.func @transform_4(%arg0: i32) -> (i32, i32) {
    %c0_i32 = arith.constant 0 : i32
    %c0_i32_0 = arith.constant 0 : i32
    %c0_i32_1 = arith.constant 0 : i32
    return %c0_i32, %c0_i32_0 : i32, i32
  }
  func.func @transform_5(%arg0: i32) -> (i32, i32) {
    %c0_i32 = arith.constant 0 : i32
    %c0_i32_0 = arith.constant 0 : i32
    %c0_i32_1 = arith.constant 0 : i32
    return %c0_i32, %c0_i32_0 : i32, i32
  }
  func.func @transform_6(%arg0: i32) -> (i32, i32) {
    %c0_i32 = arith.constant 0 : i32
    %c0_i32_0 = arith.constant 0 : i32
    return %c0_i32, %arg0 : i32, i32
  }
}

</mosaic_0001>

<llo_original>
// kernel: tpu_custom_call.1
$region0: #{tpu_custom_call.1}
  #allocation0 [shape = 'u32[]', space=smem, size = 0x4, offset = 0x4, fixed_abs, tag = 'smem constant byte address 0x4 - core index']
  #allocation1 [shape = 'u32[144,128]{1,0:T(1,128)}', space=vmem, size = 0x12000, scoped, tag = 'internal scratch']
  %s0 = inlined_call_operand.vmem [shape: f32[2,256], index: 0, kind: input, shape index: {}]
  %s1 = inlined_call_operand.vmem [shape: f32[16,1], index: 1, kind: input, shape index: {}]
  %s2 = inlined_call_operand.vmem [shape: f32[16,1], index: 2, kind: input, shape index: {}]
  %s3 = inlined_call_operand.vmem [shape: f32[16,1], index: 3, kind: input, shape index: {}]
  %s4 = inlined_call_operand.vmem [shape: f32[24,16], index: 4, kind: input, shape index: {}]
  %s5 = inlined_call_operand.vmem [shape: f32[24,1], index: 5, kind: input, shape index: {}]
  %s6 = inlined_call_operand.hbm [shape: f32[24,256], index: 6, kind: output, shape index: {}]
  %s7 = sld [smem:[#allocation0]]
  $region57: #{tpu_custom_call.1} parent=0
    _
  %s9 = ssub.s32 1, %s7
  %s10 = scalar_select 0, %s9, %s7
  $region1: #{tpu_custom_call.1} parent=0
    #allocation2 [shape = 'u8[24576]{0}', space=vmem, size = 0x6000, scoped, tag = 'output window, operand 0']
    #allocation3 [shape = 's32[2]{0}', space=sflag, size = 0x8, scoped, tag = 'scoped memory for tpu_custom_call.1']
    %11 = vsyncpa [#allocation3], 0
    %s12 = scalar_lea.sflag [#allocation3], 1
    %13 = vsyncpa %s12, 0
    loop: start=0, step=1, limit=4
    $region2: #{tpu_custom_call.1} parent=1 // loop_pre_header
      _
    $region3: #{tpu_custom_call.1} parent=1 // loop_header
      %s15 = sphi 0, %s19
      %p16 = scmp.ge.s32.totalorder %s15, 4
      %s25 = sphi 0, %s27
      %s28 = sphi 0, %s25
      %s29 = sphi 0, %s28
      %s45 = sphi 0, %s29
      %s49 = sphi 0, %s49
      %s51 = sphi 0, %s49
      %s52 = sphi 0, %s51
      %s66 = sphi 0, %s52
      %s70 = sphi 0, %s70
      %s72 = sphi 0, %s70
      %s73 = sphi 0, %s72
      %s87 = sphi 0, %s73
      %s91 = sphi 0, %s91
      %s93 = sphi 0, %s91
      %s94 = sphi 0, %s93
      %s108 = sphi 0, %s94
      %s112 = sphi 0, %s112
      %s114 = sphi 0, %s112
      %s115 = sphi 0, %s114
      %s129 = sphi 0, %s115
      %s133 = sphi 0, %s133
      %s135 = sphi 0, %s133
      %s136 = sphi 0, %s135
      %s150 = sphi 0, %s136
      %s156 = sphi 0, %s158
      %s159 = sphi 0, %s156
      %s160 = sphi 0, %s159
      %s176 = sphi 0, %s160
    $region4: #{tpu_custom_call.1} parent=1 // loop_header_branch
      %18 = sbr.rel (%p16) target = $region8
    $region5: #{tpu_custom_call.1} parent=1 // loop_body
      %s20 = ssub.s32 %s15, 1
      %s21 = ssub.s32 %s15, 2
      %s22 = sadd.s32 %s15, 1
      %s23 = ssub.s32 %s15, %s22
      %p24 = scmp.eq.s32.totalorder %s23, 0
      %s26 = sadd.s32 %s25, 1
      %s27 = scalar_select %p24, %s25, %s26
      %p30 = pneg %p24
      %p31 = scmp.eq.s32.totalorder %s15, 1
      %p32 = por %p30, %p31
      %p33 = scmp.ne.s32.totalorder %s25, %s28
      %p34 = scmp.eq.s32.totalorder %s15, 0
      %p35 = por %p33, %p34
      %p36 = scmp.ne.s32.totalorder %s25, %s28
      %p37 = scmp.eq.s32.totalorder %s20, 1
      %p38 = por %p36, %p37
      %p39 = scmp.ne.s32.totalorder %s28, %s29
      %p40 = scmp.eq.s32.totalorder %s20, 0
      %p41 = por %p39, %p40
      %p42 = scmp.ne.s32.totalorder %s28, %s29
      %p43 = scmp.eq.s32.totalorder %s21, 1
      %p44 = por %p42, %p43
      %p46 = scmp.ne.s32.totalorder %s29, %s45
      %p47 = scmp.eq.s32.totalorder %s21, 0
      %p48 = por %p46, %p47
      %s50 = sadd.s32 %s49, 1
      %p53 = scmp.eq.s32.totalorder %s15, 1
      %p54 = scmp.ne.s32.totalorder %s49, %s51
      %p55 = scmp.eq.s32.totalorder %s15, 0
      %p56 = por %p54, %p55
      %p57 = scmp.ne.s32.totalorder %s49, %s51
      %p58 = scmp.eq.s32.totalorder %s20, 1
      %p59 = por %p57, %p58
      %p60 = scmp.ne.s32.totalorder %s51, %s52
      %p61 = scmp.eq.s32.totalorder %s20, 0
      %p62 = por %p60, %p61
      %p63 = scmp.ne.s32.totalorder %s51, %s52
      %p64 = scmp.eq.s32.totalorder %s21, 1
      %p65 = por %p63, %p64
      %p67 = scmp.ne.s32.totalorder %s52, %s66
      %p68 = scmp.eq.s32.totalorder %s21, 0
      %p69 = por %p67, %p68
      %s71 = sadd.s32 %s70, 1
      %p74 = scmp.eq.s32.totalorder %s15, 1
      %p75 = scmp.ne.s32.totalorder %s70, %s72
      %p76 = scmp.eq.s32.totalorder %s15, 0
      %p77 = por %p75, %p76
      %p78 = scmp.ne.s32.totalorder %s70, %s72
      %p79 = scmp.eq.s32.totalorder %s20, 1
      %p80 = por %p78, %p79
      %p81 = scmp.ne.s32.totalorder %s72, %s73
      %p82 = scmp.eq.s32.totalorder %s20, 0
      %p83 = por %p81, %p82
      %p84 = scmp.ne.s32.totalorder %s72, %s73
      %p85 = scmp.eq.s32.totalorder %s21, 1
      %p86 = por %p84, %p85
      %p88 = scmp.ne.s32.totalorder %s73, %s87
      %p89 = scmp.eq.s32.totalorder %s21, 0
      %p90 = por %p88, %p89
      %s92 = sadd.s32 %s91, 1
      %p95 = scmp.eq.s32.totalorder %s15, 1
      %p96 = scmp.ne.s32.totalorder %s91, %s93
      %p97 = scmp.eq.s32.totalorder %s15, 0
      %p98 = por %p96, %p97
      %p99 = scmp.ne.s32.totalorder %s91, %s93
      %p100 = scmp.eq.s32.totalorder %s20, 1
      %p101 = por %p99, %p100
      %p102 = scmp.ne.s32.totalorder %s93, %s94
      %p103 = scmp.eq.s32.totalorder %s20, 0
      %p104 = por %p102, %p103
      %p105 = scmp.ne.s32.totalorder %s93, %s94
      %p106 = scmp.eq.s32.totalorder %s21, 1
      %p107 = por %p105, %p106
      %p109 = scmp.ne.s32.totalorder %s94, %s108
      %p110 = scmp.eq.s32.totalorder %s21, 0
      %p111 = por %p109, %p110
      %s113 = sadd.s32 %s112, 1
      %p116 = scmp.eq.s32.totalorder %s15, 1
      %p117 = scmp.ne.s32.totalorder %s112, %s114
      %p118 = scmp.eq.s32.totalorder %s15, 0
      %p119 = por %p117, %p118
      %p120 = scmp.ne.s32.totalorder %s112, %s114
      %p121 = scmp.eq.s32.totalorder %s20, 1
      %p122 = por %p120, %p121
      %p123 = scmp.ne.s32.totalorder %s114, %s115
      %p124 = scmp.eq.s32.totalorder %s20, 0
      %p125 = por %p123, %p124
      %p126 = scmp.ne.s32.totalorder %s114, %s115
      %p127 = scmp.eq.s32.totalorder %s21, 1
      %p128 = por %p126, %p127
      %p130 = scmp.ne.s32.totalorder %s115, %s129
      %p131 = scmp.eq.s32.totalorder %s21, 0
      %p132 = por %p130, %p131
      %s134 = sadd.s32 %s133, 1
      %p137 = scmp.eq.s32.totalorder %s15, 1
      %p138 = scmp.ne.s32.totalorder %s133, %s135
      %p139 = scmp.eq.s32.totalorder %s15, 0
      %p140 = por %p138, %p139
      %p141 = scmp.ne.s32.totalorder %s133, %s135
      %p142 = scmp.eq.s32.totalorder %s20, 1
      %p143 = por %p141, %p142
      %p144 = scmp.ne.s32.totalorder %s135, %s136
      %p145 = scmp.eq.s32.totalorder %s20, 0
      %p146 = por %p144, %p145
      %p147 = scmp.ne.s32.totalorder %s135, %s136
      %p148 = scmp.eq.s32.totalorder %s21, 1
      %p149 = por %p147, %p148
      %p151 = scmp.ne.s32.totalorder %s136, %s150
      %p152 = scmp.eq.s32.totalorder %s21, 0
      %p153 = por %p151, %p152
      %s154 = ssub.s32 %s15, %s22
      %p155 = scmp.eq.s32.totalorder %s154, 0
      %s157 = sadd.s32 %s156, 1
      %s158 = scalar_select %p155, %s156, %s157
      %p161 = pneg %p155
      %p162 = scmp.eq.s32.totalorder %s15, 1
      %p163 = por %p161, %p162
      %p164 = scmp.ne.s32.totalorder %s156, %s159
      %p165 = scmp.eq.s32.totalorder %s15, 0
      %p166 = por %p164, %p165
      %p167 = scmp.ne.s32.totalorder %s156, %s159
      %p168 = scmp.eq.s32.totalorder %s20, 1
      %p169 = por %p167, %p168
      %p170 = scmp.ne.s32.totalorder %s159, %s160
      %p171 = scmp.eq.s32.totalorder %s20, 0
      %p172 = por %p170, %p171
      %p173 = scmp.ne.s32.totalorder %s159, %s160
      %p174 = scmp.eq.s32.totalorder %s21, 1
      %p175 = por %p173, %p174
      %p177 = scmp.ne.s32.totalorder %s160, %s176
      %p178 = scmp.eq.s32.totalorder %s21, 0
      %p179 = por %p177, %p178
      %p180 = scmp.le.s32.totalorder 1, %s15
      %p181 = scmp.lt.s32.totalorder %s15, 3
      %p182 = pnand %p180, %p181
      %p183 = pneg %p182
      // Predicated region
      $region9: #{tpu_custom_call.1} parent=5 // pred_check
        _
      $region10: #{tpu_custom_call.1} parent=5 // pred_check_branch
        %185 = sbr.rel (%p182) target = $region12
      $region11: #{tpu_custom_call.1} parent=5 // pred_region
        %s186 = ssub.s32 %s15, 1
        // Predicated region
        $region13: #{tpu_custom_call.1} parent=11 // pred_check
          %p187 = pneg %p62
        $region14: #{tpu_custom_call.1} parent=11 // pred_check_branch
          %189 = sbr.rel (%p187) target = $region16
        $region15: #{tpu_custom_call.1} parent=11 // pred_region
          _
        $region16: #{tpu_custom_call.1} parent=11 // pred_fallthru
          _
        // Predicated region
        $region17: #{tpu_custom_call.1} parent=11 // pred_check
          %p190 = pneg %p83
        $region18: #{tpu_custom_call.1} parent=11 // pred_check_branch
          %192 = sbr.rel (%p190) target = $region20
        $region19: #{tpu_custom_call.1} parent=11 // pred_region
          _
        $region20: #{tpu_custom_call.1} parent=11 // pred_fallthru
          _
        // Predicated region
        $region21: #{tpu_custom_call.1} parent=11 // pred_check
          %p193 = pneg %p104
        $region22: #{tpu_custom_call.1} parent=11 // pred_check_branch
          %195 = sbr.rel (%p193) target = $region24
        $region23: #{tpu_custom_call.1} parent=11 // pred_region
          _
        $region24: #{tpu_custom_call.1} parent=11 // pred_fallthru
          _
        // Predicated region
        $region25: #{tpu_custom_call.1} parent=11 // pred_check
          %p196 = pneg %p125
        $region26: #{tpu_custom_call.1} parent=11 // pred_check_branch
          %198 = sbr.rel (%p196) target = $region28
        $region27: #{tpu_custom_call.1} parent=11 // pred_region
          _
        $region28: #{tpu_custom_call.1} parent=11 // pred_fallthru
          _
        // Predicated region
        $region29: #{tpu_custom_call.1} parent=11 // pred_check
          %p199 = pneg %p146
        $region30: #{tpu_custom_call.1} parent=11 // pred_check_branch
          %201 = sbr.rel (%p199) target = $region32
        $region31: #{tpu_custom_call.1} parent=11 // pred_region
          _
        $region32: #{tpu_custom_call.1} parent=11 // pred_fallthru
          _
      $region12: #{tpu_custom_call.1} parent=5 // pred_fallthru
        _
      %p202 = scmp.lt.s32.totalorder %s15, 2
      // Predicated region
      $region33: #{tpu_custom_call.1} parent=5 // pred_check
        %p203 = pneg %p202
      $region34: #{tpu_custom_call.1} parent=5 // pred_check_branch
        %205 = sbr.rel (%p203) target = $region36
      $region35: #{tpu_custom_call.1} parent=5 // pred_region
        // Predicated region
        $region37: #{tpu_custom_call.1} parent=35 // pred_check
          %p206 = pneg %p35
        $region38: #{tpu_custom_call.1} parent=35 // pred_check_branch
          %208 = sbr.rel (%p206) target = $region40
        $region39: #{tpu_custom_call.1} parent=35 // pred_region
          %p209 = scmp.lt.s32.totalorder %s15, 1
          %s210 = scalar_select %p209, %s15, 1
          %s211 = smul.addr %s210, 2
          %s212 = scalar_lea.vmem %s0, %s211
        $region40: #{tpu_custom_call.1} parent=35 // pred_fallthru
          _
      $region36: #{tpu_custom_call.1} parent=5 // pred_fallthru
        _
      %p213 = scmp.le.s32.totalorder 1, %s15
      %p214 = scmp.lt.s32.totalorder %s15, 3
      %p215 = pnand %p213, %p214
      %p216 = pneg %p215
      // Predicated region
      $region41: #{tpu_custom_call.1} parent=5 // pred_check
        _
      $region42: #{tpu_custom_call.1} parent=5 // pred_check_branch
        %218 = sbr.rel (%p215) target = $region44
      $region43: #{tpu_custom_call.1} parent=5 // pred_region
        %s219 = ssub.s32 %s15, 1
        %p220 = scmp.lt.s32.totalorder %s20, 1
        %s221 = scalar_select %p220, %s20, 1
        %s222 = smul.addr %s221, 2
        %s223 = scalar_lea.vmem %s0, %s222
        %p224 = pneg %p41
        %p225 = pneg %p38
        %p226 = pneg %p62
        %p227 = pneg %p59
        %p228 = pneg %p83
        %p229 = pneg %p80
        %p230 = pneg %p104
        %p231 = pneg %p101
        %p232 = pneg %p125
        %p233 = pneg %p122
        %p234 = pneg %p146
        %p235 = pneg %p143
        %p236 = pneg %p172
        %p237 = pneg %p169
        %s238 = sand.u32 %s159, 1
        %s239 = scalar_lea.sflag [#allocation3], %s238
        %s240 = sand.u32 %s159, 1
        %s241 = smul.addr %s240, 24
        %s242 = scalar_lea.vmem [#allocation2], %s241
        %p243 = scmp.lt.s32.totalorder %s20, 1
        %s244 = scalar_select %p243, %s20, 1
        %s245 = smul.addr %s244, 2
        %s246 = scalar_lea.vmem %s0, %s245
        %v247 = vld [vmem:[%s246] sm:$0x1]
        %v248 = vld [vmem:[%s246 + $0x1] sm:$0x1]
        %vm249 = vcmp.gt.f32.partialorder %v248, 0.0
        %v250 = vld [vmem:[%s1] sm:$0xff]
        %v251 = vld [vmem:[%s1 + $0x8] sm:$0xff]
        %v252 = vld [vmem:[%s2] sm:$0xff]
        %v253 = vld [vmem:[%s2 + $0x8] sm:$0xff]
        %v254 = vld [vmem:[%s3] sm:$0xff]
        %v255 = vld [vmem:[%s3 + $0x8] sm:$0xff]
        %257 = vset.pattern.permute.xlu0 0
        %258 = vperm.xlu0 %257, %v254
        %v259 = vpop.permute.xlu0 %258
        %262 = vset.pattern.permute.xlu0 0
        %263 = vperm.xlu0 %262, %v255
        %v264 = vpop.permute.xlu0 %263
        %v266 = vlaneseq
        %v267 = vshrl.u32 %v266, 7
        %v268 = vsub.s32 0, %v267
        %v269 = vrot.slane %v247, %v268
        %v270 = vmul.f32 %v259, %v269
        %v271 = vmul.f32 %v264, %v269
        %v272 = vmul.f32 %v270, %v270
        %v273 = vmul.f32 %v271, %v271
        %v274 = vadd.f32 %v272, 1.0
        %v275 = vadd.f32 %v273, 1.0
        %v276 = vrcp.pop %v274
        %v277 = vrcp.pop %v275
        %279 = vset.pattern.permute.xlu0 0
        %280 = vperm.xlu0 %279, %v252
        %v281 = vpop.permute.xlu0 %280
        %284 = vset.pattern.permute.xlu0 0
        %285 = vperm.xlu0 %284, %v253
        %v286 = vpop.permute.xlu0 %285
        %v288 = vmul.f32 %v281, %v276
        %v289 = vmul.f32 %v286, %v277
        %291 = vset.pattern.permute.xlu0 0
        %292 = vperm.xlu0 %291, %v250
        %v293 = vpop.permute.xlu0 %292
        %296 = vset.pattern.permute.xlu0 0
        %297 = vperm.xlu0 %296, %v251
        %v298 = vpop.permute.xlu0 %297
        %v300 = vadd.f32 %v288, %v293
        %v301 = vadd.f32 %v289, %v298
        %v302 = vsel %vm249, 1, 0
        %v303 = vlaneseq
        %v304 = vshrl.u32 %v303, 7
        %v305 = vsub.s32 0, %v304
        %v306 = vrot.slane %v302, %v305
        %vm307 = vcmp.eq.s32.totalorder %v306, 1
        %v308 = vsel %vm307, %v300, 0.0
        %v309 = vsel %vm307, %v301, 0.0
        %v310 = vld [vmem:[%s4] sm:$0xff]
        %v311 = vld [vmem:[%s4 + $0x8] sm:$0xff]
        %v312 = vld [vmem:[%s4 + $0x10] sm:$0xff]
        %v313 = vld [vmem:[%s5] sm:$0xff]
        %v314 = vld [vmem:[%s5 + $0x8] sm:$0xff]
        %v315 = vld [vmem:[%s5 + $0x10] sm:$0xff]
        %317 = vset.pattern.permute.xlu0 0
        %318 = vperm.xlu0 %317, %v313
        %v319 = vpop.permute.xlu0 %318
        %322 = vset.pattern.permute.xlu0 0
        %323 = vperm.xlu0 %322, %v314
        %v324 = vpop.permute.xlu0 %323
        %327 = vset.pattern.permute.xlu0 0
        %328 = vperm.xlu0 %327, %v315
        %v329 = vpop.permute.xlu0 %328
        %vm331 = vcmask 130048
        %v333 = vsel %vm331, %v310, 0
        %v336 = vsel %vm331, %v311, 0
        %v339 = vsel %vm331, %v312, 0
        %341 = vmatprep.subr.mxu0 0.0
        %342 = vmatpush1.msra.mxu0 %v308
        %343 = vmatprep.subr.mxu0 0.0
        %344 = vmatpush1.msra.mxu0 %v309
        %345 = vmatprep.subr.mxu0 0.0
        %346 = vmatpush1.msra.mxu0 0.0
        %347 = vmatprep.subr.mxu0 0.0
        %348 = vmatpush1.msra.mxu0 0.0
        %349 = vmatprep.subr.mxu0 0.0
        %350 = vmatpush1.msra.mxu0 0.0
        %351 = vmatprep.subr.mxu0 0.0
        %352 = vmatpush1.msra.mxu0 0.0
        %353 = vmatprep.subr.mxu0 0.0
        %354 = vmatpush1.msra.mxu0 0.0
        %355 = vmatprep.subr.mxu0 0.0
        %356 = vmatpush1.msra.mxu0 0.0
        %357 = vmatprep.subr.mxu0 0.0
        %358 = vmatpush1.msra.mxu0 0.0
        %359 = vmatprep.subr.mxu0 0.0
        %360 = vmatpush1.msra.mxu0 0.0
        %361 = vmatprep.subr.mxu0 0.0
        %362 = vmatpush1.msra.mxu0 0.0
        %363 = vmatprep.subr.mxu0 0.0
        %364 = vmatpush1.msra.mxu0 0.0
        %365 = vmatprep.subr.mxu0 0.0
        %366 = vmatpush1.msra.mxu0 0.0
        %367 = vmatprep.subr.mxu0 0.0
        %368 = vmatpush1.msra.mxu0 0.0
        %369 = vmatprep.subr.mxu0 0.0
        %370 = vmatpush1.msra.mxu0 0.0
        %371 = vmatprep.subr.mxu0 0.0
        %372 = vmatpush1.msra.mxu0 0.0
        %373 = vmatprep.subr.mxu0 0.0
        %374 = vmatpush1.msra.mxu0 0.0
        %375 = vmatprep.subr.mxu0 0.0
        %376 = vmatpush1.msra.mxu0 0.0
        %377 = vmatprep.subr.mxu0 0.0
        %378 = vmatpush1.msra.mxu0 0.0
        %379 = vmatprep.subr.mxu0 0.0
        %380 = vmatpush1.msra.mxu0 0.0
        %381 = vmatprep.subr.mxu0 0.0
        %382 = vmatpush1.msra.mxu0 0.0
        %383 = vmatprep.subr.mxu0 0.0
        %384 = vmatpush1.msra.mxu0 0.0
        %385 = vmatprep.subr.mxu0 0.0
        %386 = vmatpush1.msra.mxu0 0.0
        %387 = vmatprep.subr.mxu0 0.0
        %388 = vmatpush1.msra.mxu0 0.0
        %389 = vmatprep.subr.mxu0 0.0
        %390 = vmatpush1.msra.mxu0 0.0
        %391 = vmatprep.subr.mxu0 0.0
        %392 = vmatpush1.msra.mxu0 0.0
        %393 = vmatprep.subr.mxu0 0.0
        %394 = vmatpush1.msra.mxu0 0.0
        %395 = vmatprep.subr.mxu0 0.0
        %396 = vmatpush1.msra.mxu0 0.0
        %397 = vmatprep.subr.mxu0 0.0
        %398 = vmatpush1.msra.mxu0 0.0
        %399 = vmatprep.subr.mxu0 0.0
        %400 = vmatpush1.msra.mxu0 0.0
        %401 = vmatprep.subr.mxu0 0.0
        %402 = vmatpush1.msra.mxu0 0.0
        %403 = vmatprep.subr.mxu0 0.0
        %404 = vmatpush1.msra.mxu0 0.0
        %405 = vmatprep.mubr.f32.mxu0 0.0
        %406 = vmatmul.mubr.f32.gmra.mrb[0].mxu0 %v333
        %v407 = vpop.f32.mrb[0].mxu0
        %v408 = vadd.f32 %v319, %v407
        %v409 = vpop.f32.mrb[0].mxu0
        %410 = vmatprep.mubr.f32.mxu0 0.0
        %411 = vmatmul.mubr.f32.gmra.mrb[0].mxu0 %v336
        %v412 = vpop.f32.mrb[0].mxu0
        %v413 = vadd.f32 %v324, %v412
        %v414 = vpop.f32.mrb[0].mxu0
        %415 = vmatprep.mubr.f32.mxu0 0.0
        %416 = vmatmul.mubr.f32.gmra.mrb[0].mxu0 %v339
        %v417 = vpop.f32.mrb[0].mxu0
        %v418 = vadd.f32 %v329, %v417
        %v419 = vpop.f32.mrb[0].mxu0
        %420 = vdwg.mxu0
        %421 = vst [vmem:[%s242] sm:$0xff] %v408
        %422 = vst [vmem:[%s242 + $0x8] sm:$0xff] %v413
        %423 = vst [vmem:[%s242 + $0x10] sm:$0xff] %v418
        %s424 = sand.u32 %s159, 1
        %s425 = scalar_lea.sflag [#allocation3], %s424
        %s426 = sand.u32 %s159, 1
        %s427 = smul.addr %s426, 24
        %s428 = scalar_lea.vmem [#allocation2], %s427
        // Predicated region
        $region45: #{tpu_custom_call.1} parent=43 // pred_check
          %p429 = pneg %p169
        $region46: #{tpu_custom_call.1} parent=43 // pred_check_branch
          %431 = sbr.rel (%p429) target = $region48
        $region47: #{tpu_custom_call.1} parent=43 // pred_region
          %s433 = ssub.s32 384, 384
          %434 = vsyncadd %s425, %s433
          %s435 = smul.addr %s20, 128
          %s436 = scalar_lea.hbm %s6, %s435
          %s437 = sshll.u32 %s428, 4
          %s438 = int_to_ptr.vmem [resolvable:$true] %s437
          %443 = dma.vmem_to_hbm [thread:$0]  %s438, 384, %s436, %s425, 128, 256, 8
        $region48: #{tpu_custom_call.1} parent=43 // pred_fallthru
          _
      $region44: #{tpu_custom_call.1} parent=5 // pred_fallthru
        _
      %p444 = scmp.le.s32.totalorder 2, %s15
      // Predicated region
      $region49: #{tpu_custom_call.1} parent=5 // pred_check
        %p445 = pneg %p444
      $region50: #{tpu_custom_call.1} parent=5 // pred_check_branch
        %447 = sbr.rel (%p445) target = $region52
      $region51: #{tpu_custom_call.1} parent=5 // pred_region
        %s448 = ssub.s32 %s15, 2
        // Predicated region
        $region53: #{tpu_custom_call.1} parent=51 // pred_check
          %p449 = pneg %p175
        $region54: #{tpu_custom_call.1} parent=51 // pred_check_branch
          %451 = sbr.rel (%p449) target = $region56
        $region55: #{tpu_custom_call.1} parent=51 // pred_region
          %s452 = sand.u32 %s160, 1
          %s453 = scalar_lea.sflag [#allocation3], %s452
          %s454 = sand.u32 %s160, 1
          %s455 = smul.addr %s454, 24
          %s456 = scalar_lea.vmem [#allocation2], %s455
          %457 = dma.done %s453, 384
        $region56: #{tpu_custom_call.1} parent=51 // pred_fallthru
          _
      $region52: #{tpu_custom_call.1} parent=5 // pred_fallthru
        _
    $region6: #{tpu_custom_call.1} parent=1 // loop_footer
      %s19 = sadd.s32 1, %s15
    $region7: #{tpu_custom_call.1} parent=1 // loop_footer_branch
      %14 = sbr.rel target = $region3
    $region8: #{tpu_custom_call.1} parent=1 // loop_exit
      _
    %458 = vsyncpa [#allocation3], 1
    %s459 = scalar_lea.sflag [#allocation3], 1
    %460 = vsyncpa %s459, 1

</llo_original>
